<compile_context>
chip_gen: v7x
topology: tpu7x:2x2x1
jax: 0.10.0
libtpu: 0.0.40
codegen_flags: <defaults>
</compile_context>

<pallas_src>
import functools

import jax
import jax.numpy as jnp
from jax.experimental import pallas as pl
from jax.experimental.pallas import tpu as pltpu


def _round_up(x, m):
    return ((x + m - 1) // m) * m


# ---------------------------------------------------------------------------
# Kernel
# ---------------------------------------------------------------------------
def _freq_bias_gather_kernel(idx_ref, w_ref, out_ref):
    """Exact embedding-row gather.

    idx_ref : (batch_p,) int32, SMEM (scalar-prefetched joint indices)
    w_ref   : (num_rows, num_rels) f32, VMEM-resident weight table
    out_ref : (tb, num_rels) f32 output tile (tb is a multiple of 8)
    """
    tb = out_ref.shape[0]
    n_groups = tb // 8
    base = pl.multiple_of(pl.program_id(0) * tb, 8)

    def group_body(g, carry):
        start = pl.multiple_of(g * 8, 8)
        # Gather 8 (generally non-contiguous) table rows, assemble them into
        # one (8, num_rels) sublane group, and store the group unmasked.
        rows = [
            w_ref[pl.ds(idx_ref[base + start + r], 1), :] for r in range(8)
        ]
        out_ref[pl.ds(start, 8), :] = jnp.concatenate(rows, axis=0)
        return carry

    unroll = n_groups if n_groups <= 8 else 8
    jax.lax.fori_loop(0, n_groups, group_body, 0, unroll=unroll)


# ---------------------------------------------------------------------------
# Wrapper
# ---------------------------------------------------------------------------
@functools.partial(jax.jit, static_argnums=(2,), static_argnames=("tile_b",))
def frequency_bias_forward(labels, weight, num_objs, *, tile_b=256):
    """labels: [batch, 2] int; weight: [num_objs*num_objs, num_rels] f32."""
    batch = labels.shape[0]
    num_rows, num_rels = weight.shape
    assert num_rows == num_objs * num_objs

    labels = labels.astype(jnp.int32)
    # Clamp so a bad label can never trigger an OOB table read (PyTorch would
    # raise an index error instead).
    idx = jnp.clip(labels[:, 0] * num_objs + labels[:, 1], 0, num_rows - 1)

    # Batch tile: multiple of 8 (sublane groups), and small enough that the
    # grid has >= 2 tiles so the "parallel" axis can split across v7x's 2 TCs.
    tb = _round_up(max(1, int(tile_b)), 8)
    if batch > 8:
        tb = min(tb, _round_up(pl.cdiv(batch, 2), 8))
    tb = max(8, min(tb, _round_up(batch, 8)))

    grid = pl.cdiv(batch, tb)
    batch_p = grid * tb
    if batch_p != batch:
        # Only the tiny int32 index vector is padded; padded rows gather row 0
        # and their output rows are clipped by Pallas at the edge block.
        idx = jnp.pad(idx, (0, batch_p - batch))

    # VMEM budget (lane-padded layout), counting the resident table's default
    # double-buffering; cap below v7x's 64 MiB to leave headroom for the
    # output double-buffers and internal scratch.
    lane_rels = _round_up(num_rels, 128)
    table_vmem = _round_up(num_rows, 8) * lane_rels * 4
    out_tile_vmem = tb * lane_rels * 4
    vmem_needed = 2 * table_vmem + 2 * out_tile_vmem + (1 << 20)
    vmem_limit = int(min(max(vmem_needed, 16 << 20), 48 << 20))
    # TODO(synk): if 2*table_vmem ever exceeds the cap (far beyond VG-scale
    # tables), single-buffer the table (pipeline_mode=pl.Buffered(1)) or
    # row-chunk it on a second grid axis.

    cost = pl.CostEstimate(
        flops=0,
        transcendentals=0,
        bytes_accessed=int(
            num_rows * num_rels * 4 + batch * num_rels * 4 + batch_p * 4
        ),
    )

    out = pl.pallas_call(
        _freq_bias_gather_kernel,
        out_shape=jax.ShapeDtypeStruct((batch, num_rels), weight.dtype),
        grid_spec=pltpu.PrefetchScalarGridSpec(
            num_scalar_prefetch=1,
            grid=(grid,),
            in_specs=[
                # Full table, constant block index -> fetched once per core
                # and kept VMEM-resident across all batch tiles.
                pl.BlockSpec((num_rows, num_rels), lambda i, idx_ref: (0, 0)),
            ],
            out_specs=pl.BlockSpec((tb, num_rels), lambda i, idx_ref: (i, 0)),
        ),
        compiler_params=pltpu.CompilerParams(
            dimension_semantics=("parallel",),
            vmem_limit_bytes=vmem_limit,
        ),
        cost_estimate=cost,
    )(idx, weight)
    return out


class FrequencyBiasPallas:
    """JAX/Pallas port of FrequencyBias (forward == index_with_labels)."""

    def __init__(self, pred_dist):
        pred_dist = jnp.asarray(pred_dist, jnp.float32)
        assert pred_dist.shape[0] == pred_dist.shape[1]
        self.num_objs = int(pred_dist.shape[0])
        self.num_rels = int(pred_dist.shape[2])
        # nn.Embedding(num_objs**2, num_rels).weight <- pred_dist.view(-1, R).
        # All one-time table prep is hoisted here (nothing re-done per call).
        self.weight = pred_dist.reshape(
            self.num_objs * self.num_objs, self.num_rels
        )

    def index_with_labels(self, labels):
        return frequency_bias_forward(labels, self.weight, self.num_objs)

    def forward(self, labels):
        return self.index_with_labels(labels)

    def __call__(self, labels):
        return self.index_with_labels(labels)


# ---------------------------------------------------------------------------
# Demo / self-test
# ---------------------------------------------------------------------------
if __name__ == "__main__":
    # Synthetic "statistics['pred_dist']": [num_objs, num_objs, num_rels]
    num_objs = 8
    num_rels = 32
    batch = 6

    key = jax.random.PRNGKey(0)
    k_dist, k_s, k_o = jax.random.split(key, 3)

    pred_dist = jax.nn.softmax(
        jax.random.normal(k_dist, (num_objs, num_objs, num_rels), jnp.float32),
        axis=-1,
    )
    fb = FrequencyBiasPallas(pred_dist)

    labels = jnp.stack(
        [
            jax.random.randint(k_s, (batch,), 0, num_objs, jnp.int32),
            jax.random.randint(k_o, (batch,), 0, num_objs, jnp.int32),
        ],
        axis=1,
    )

    # Pure-JAX reference of the PyTorch forward; gather path must be bit-exact.
    ref = fb.weight[labels[:, 0] * num_objs + labels[:, 1]]
    out = jax.block_until_ready(fb(labels))
    assert out.shape == (batch, num_rels)
    assert out.dtype == jnp.float32
    assert jnp.array_equal(out, ref)

    # Larger batch: multi-tile grid (>=2 tiles) + partial edge tile.
    kb1, kb2 = jax.random.split(jax.random.PRNGKey(1))
    big = 300
    labels_big = jnp.stack(
        [
            jax.random.randint(kb1, (big,), 0, num_objs, jnp.int32),
            jax.random.randint(kb2, (big,), 0, num_objs, jnp.int32),
        ],
        axis=1,
    )
    ref_big = fb.weight[labels_big[:, 0] * num_objs + labels_big[:, 1]]
    out_big = jax.block_until_ready(fb(labels_big))
    assert out_big.shape == (big, num_rels)
    assert jnp.array_equal(out_big, ref_big)

    print("KERNEL_OK")
</pallas_src>

<mosaic_0001>
module attributes {stable_mosaic.version = 11 : i64} {
  func.func @_freq_bias_gather_kernel(%arg0: i32, %arg1: memref<8xi32, #tpu.memory_space<smem>>, %arg2: memref<64x32xf32, #tpu.memory_space<vmem>>, %arg3: memref<8x32xf32, #tpu.memory_space<vmem>>) attributes {dimension_semantics = [#tpu.dimension_semantics<parallel>], iteration_bounds = array<i64: 1>, scalar_prefetch = 1 : i64, scratch_operands = 0 : i64, tpu.core_type = #tpu.core_type<tc>, window_params = [{pipeline_mode = #tpu.pipeline_mode<synchronous>, transform_indices = @transform_0, window_bounds = array<i64: 64, 32>}, {transform_indices = @transform_1, window_bounds = array<i64: 8, 32>}]} {
    %c8_i32 = arith.constant 8 : i32
    %0 = arith.muli %arg0, %c8_i32 : i32
    %1 = tpu.assume_multiple %0, 8 : i32
    %c0_i32 = arith.constant 0 : i32
    %c8_i32_0 = arith.constant 8 : i32
    %2 = arith.muli %c0_i32, %c8_i32_0 : i32
    %3 = tpu.assume_multiple %2, 8 : i32
    %4 = arith.addi %1, %3 : i32
    %c0_i32_1 = arith.constant 0 : i32
    %5 = arith.addi %4, %c0_i32_1 : i32
    %6 = arith.index_cast %5 : i32 to index
    %7 = memref.load %arg1[%6] : memref<8xi32, #tpu.memory_space<smem>>
    %8 = arith.index_cast %7 : i32 to index
    %c0 = arith.constant 0 : index
    %9 = vector.load %arg2[%8, %c0] : memref<64x32xf32, #tpu.memory_space<vmem>>, vector<1x32xf32>
    %10 = arith.addi %1, %3 : i32
    %c1_i32 = arith.constant 1 : i32
    %11 = arith.addi %10, %c1_i32 : i32
    %12 = arith.index_cast %11 : i32 to index
    %13 = memref.load %arg1[%12] : memref<8xi32, #tpu.memory_space<smem>>
    %14 = arith.index_cast %13 : i32 to index
    %c0_2 = arith.constant 0 : index
    %15 = vector.load %arg2[%14, %c0_2] : memref<64x32xf32, #tpu.memory_space<vmem>>, vector<1x32xf32>
    %16 = arith.addi %1, %3 : i32
    %c2_i32 = arith.constant 2 : i32
    %17 = arith.addi %16, %c2_i32 : i32
    %18 = arith.index_cast %17 : i32 to index
    %19 = memref.load %arg1[%18] : memref<8xi32, #tpu.memory_space<smem>>
    %20 = arith.index_cast %19 : i32 to index
    %c0_3 = arith.constant 0 : index
    %21 = vector.load %arg2[%20, %c0_3] : memref<64x32xf32, #tpu.memory_space<vmem>>, vector<1x32xf32>
    %22 = arith.addi %1, %3 : i32
    %c3_i32 = arith.constant 3 : i32
    %23 = arith.addi %22, %c3_i32 : i32
    %24 = arith.index_cast %23 : i32 to index
    %25 = memref.load %arg1[%24] : memref<8xi32, #tpu.memory_space<smem>>
    %26 = arith.index_cast %25 : i32 to index
    %c0_4 = arith.constant 0 : index
    %27 = vector.load %arg2[%26, %c0_4] : memref<64x32xf32, #tpu.memory_space<vmem>>, vector<1x32xf32>
    %28 = arith.addi %1, %3 : i32
    %c4_i32 = arith.constant 4 : i32
    %29 = arith.addi %28, %c4_i32 : i32
    %30 = arith.index_cast %29 : i32 to index
    %31 = memref.load %arg1[%30] : memref<8xi32, #tpu.memory_space<smem>>
    %32 = arith.index_cast %31 : i32 to index
    %c0_5 = arith.constant 0 : index
    %33 = vector.load %arg2[%32, %c0_5] : memref<64x32xf32, #tpu.memory_space<vmem>>, vector<1x32xf32>
    %34 = arith.addi %1, %3 : i32
    %c5_i32 = arith.constant 5 : i32
    %35 = arith.addi %34, %c5_i32 : i32
    %36 = arith.index_cast %35 : i32 to index
    %37 = memref.load %arg1[%36] : memref<8xi32, #tpu.memory_space<smem>>
    %38 = arith.index_cast %37 : i32 to index
    %c0_6 = arith.constant 0 : index
    %39 = vector.load %arg2[%38, %c0_6] : memref<64x32xf32, #tpu.memory_space<vmem>>, vector<1x32xf32>
    %40 = arith.addi %1, %3 : i32
    %c6_i32 = arith.constant 6 : i32
    %41 = arith.addi %40, %c6_i32 : i32
    %42 = arith.index_cast %41 : i32 to index
    %43 = memref.load %arg1[%42] : memref<8xi32, #tpu.memory_space<smem>>
    %44 = arith.index_cast %43 : i32 to index
    %c0_7 = arith.constant 0 : index
    %45 = vector.load %arg2[%44, %c0_7] : memref<64x32xf32, #tpu.memory_space<vmem>>, vector<1x32xf32>
    %46 = arith.addi %1, %3 : i32
    %c7_i32 = arith.constant 7 : i32
    %47 = arith.addi %46, %c7_i32 : i32
    %48 = arith.index_cast %47 : i32 to index
    %49 = memref.load %arg1[%48] : memref<8xi32, #tpu.memory_space<smem>>
    %50 = arith.index_cast %49 : i32 to index
    %c0_8 = arith.constant 0 : index
    %51 = vector.load %arg2[%50, %c0_8] : memref<64x32xf32, #tpu.memory_space<vmem>>, vector<1x32xf32>
    %52 = tpu.concatenate %9, %15, %21, %27, %33, %39, %45, %51 in 0 : vector<1x32xf32>, vector<1x32xf32>, vector<1x32xf32>, vector<1x32xf32>, vector<1x32xf32>, vector<1x32xf32>, vector<1x32xf32>, vector<1x32xf32> -> vector<8x32xf32>
    %53 = arith.index_cast %3 : i32 to index
    %c0_9 = arith.constant 0 : index
    %54 = vector.load %arg3[%53, %c0_9] : memref<8x32xf32, #tpu.memory_space<vmem>>, vector<8x32xf32>
    tpu.vector_store %arg3[%53, %c0_9], %52 {strides = array<i32>} : memref<8x32xf32, #tpu.memory_space<vmem>>, vector<8x32xf32>,
    %c1_i32_10 = arith.constant 1 : i32
    return
  }
  func.func @transform_0(%arg0: i32, %arg1: memref<8xi32, #tpu.memory_space<smem>>) -> (i32, i32) {
    %c0_i32 = arith.constant 0 : i32
    %c0_i32_0 = arith.constant 0 : i32
    %c0_i32_1 = arith.constant 0 : i32
    return %c0_i32, %c0_i32_0 : i32, i32
  }
  func.func @transform_1(%arg0: i32, %arg1: memref<8xi32, #tpu.memory_space<smem>>) -> (i32, i32) {
    %c0_i32 = arith.constant 0 : i32
    %c0_i32_0 = arith.constant 0 : i32
    return %arg0, %c0_i32 : i32, i32
  }
}

</mosaic_0001>

<llo_original>
// kernel: frequency_bias_forward.1
$region0: #{frequency_bias_forward.1}
  #allocation0 [shape = 'u32[]', space=smem, size = 0x4, offset = 0x4, fixed_abs, tag = 'smem constant byte address 0x4 - core index']
  #allocation1 [shape = 'u32[144,128]{1,0:T(1,128)}', space=vmem, size = 0x12000, scoped, tag = 'internal scratch']
  #allocation2 [shape = 's32[1]{0}', space=sflag, size = 0x4, scoped, tag = 'scoped memory for frequency_bias_forward.1']
  #allocation3 [shape = 'u8[512]{0}', space=smem, size = 0x200, scoped, tag = 'prefetched SMEM operand 0']
  %s0 = inlined_call_operand.vmem [shape: s32[8], index: 0, kind: input, shape index: {}]
  %s1 = inlined_call_operand.vmem [shape: f32[64,32], index: 1, kind: input, shape index: {}]
  %s2 = inlined_call_operand.hbm [shape: f32[6,32], index: 2, kind: output, shape index: {}]
  %s3 = sld [smem:[#allocation0]]
  $region14: #{frequency_bias_forward.1} parent=0
    _
  %s5 = ssub.s32 1, %s3
  %s6 = scalar_select 0, %s5, %s3
  %s7 = sshll.u32 %s0, 4
  %s8 = int_to_ptr.vmem [resolvable:$true] %s7
  %10 = dma.vmem_to_smem %s8, 16, [#allocation3], [#allocation2]
  %11 = dma.done [#allocation2], 16
  %12 = sfence
  $region1: #{frequency_bias_forward.1} parent=0
    #allocation4 [shape = 'u8[4096]{0}', space=vmem, size = 0x1000, scoped, tag = 'output window, operand 0, single buffered']
    #allocation5 [shape = 's32[1]{0}', space=sflag, size = 0x4, scoped, tag = 'scoped memory for frequency_bias_forward.1']
    %13 = vsyncpa [#allocation5], 0
    // Predicated region
    $region2: #{frequency_bias_forward.1} parent=1 // pred_check
      _
    $region3: #{frequency_bias_forward.1} parent=1 // pred_check_branch
      %15 = sbr.rel (0) target = $region5
    $region4: #{frequency_bias_forward.1} parent=1 // pred_region
      _
    $region5: #{frequency_bias_forward.1} parent=1 // pred_fallthru
      _
    %s16 = smul.u32 0, 8
    %s17 = sadd.s32 %s16, 0
    %s18 = sld [smem:[#allocation3 + %s17]]
    %s19 = scalar_lea.vmem %s1, %s18
    %v20 = vld [vmem:[%s19] sm:$0x1]
    %s21 = sadd.s32 %s17, 1
    %s22 = sld [smem:[#allocation3 + %s21]]
    %s23 = scalar_lea.vmem %s1, %s22
    %v24 = vld [vmem:[%s23] sm:$0x1]
    %s25 = sadd.s32 %s17, 2
    %s26 = sld [smem:[#allocation3 + %s25]]
    %s27 = scalar_lea.vmem %s1, %s26
    %v28 = vld [vmem:[%s27] sm:$0x1]
    %s29 = sadd.s32 %s17, 3
    %s30 = sld [smem:[#allocation3 + %s29]]
    %s31 = scalar_lea.vmem %s1, %s30
    %v32 = vld [vmem:[%s31] sm:$0x1]
    %s33 = sadd.s32 %s17, 4
    %s34 = sld [smem:[#allocation3 + %s33]]
    %s35 = scalar_lea.vmem %s1, %s34
    %v36 = vld [vmem:[%s35] sm:$0x1]
    %s37 = sadd.s32 %s17, 5
    %s38 = sld [smem:[#allocation3 + %s37]]
    %s39 = scalar_lea.vmem %s1, %s38
    %v40 = vld [vmem:[%s39] sm:$0x1]
    %s41 = sadd.s32 %s17, 6
    %s42 = sld [smem:[#allocation3 + %s41]]
    %s43 = scalar_lea.vmem %s1, %s42
    %v44 = vld [vmem:[%s43] sm:$0x1]
    %s45 = sadd.s32 %s17, 7
    %s46 = sld [smem:[#allocation3 + %s45]]
    %s47 = scalar_lea.vmem %s1, %s46
    %v48 = vld [vmem:[%s47] sm:$0x1]
    %v50 = vrot.slane %v24, 7
    %v53 = vrot.slane %v28, 6
    %v56 = vrot.slane %v32, 5
    %v59 = vrot.slane %v36, 4
    %v62 = vrot.slane %v40, 3
    %v65 = vrot.slane %v44, 2
    %v68 = vrot.slane %v48, 1
    %vm70 = vcmask 1040384
    %v71 = vsel %vm70, %v20, %v50
    %vm72 = vcmask 1041408
    %v73 = vsel %vm72, %v71, %v53
    %vm74 = vcmask 1042432
    %v75 = vsel %vm74, %v73, %v56
    %vm76 = vcmask 1043456
    %v77 = vsel %vm76, %v75, %v59
    %vm78 = vcmask 1044480
    %v79 = vsel %vm78, %v77, %v62
    %vm80 = vcmask 1045504
    %v81 = vsel %vm80, %v79, %v65
    %vm82 = vcmask 1046528
    %v83 = vsel %vm82, %v81, %v68
    %vm84 = vcmask 261120
    %85 = vst.msk [vmem:[#allocation4] sm:$0xff] %vm84, %v83
    // Predicated region
    $region6: #{frequency_bias_forward.1} parent=1 // pred_check
      _
    $region7: #{frequency_bias_forward.1} parent=1 // pred_check_branch
      %87 = sbr.rel (0) target = $region9
    $region8: #{frequency_bias_forward.1} parent=1 // pred_region
      %s89 = ssub.s32 128, 128
      %90 = vsyncadd [#allocation5], %s89
      %s92 = sshll.u32 [#allocation4], 4
      %s93 = int_to_ptr.vmem [resolvable:$true] %s92
      %95 = dma.vmem_to_hbm [thread:$0]  %s93, 128, %s2, [#allocation5]
    $region9: #{frequency_bias_forward.1} parent=1 // pred_fallthru
      _
    // Predicated region
    $region10: #{frequency_bias_forward.1} parent=1 // pred_check
      _
    $region11: #{frequency_bias_forward.1} parent=1 // pred_check_branch
      %97 = sbr.rel (0) target = $region13
    $region12: #{frequency_bias_forward.1} parent=1 // pred_region
      %98 = dma.done [#allocation5], 128
    $region13: #{frequency_bias_forward.1} parent=1 // pred_fallthru
      _
    %99 = vsyncpa [#allocation5], 1

</llo_original>
